<compile_context>
chip_gen: v7x
topology: tpu7x:2x2x1
jax: 0.10.0
libtpu: 0.0.40
codegen_flags: <defaults>
</compile_context>

<pallas_src>
import functools

import jax
import jax.numpy as jnp
from jax.experimental import pallas as pl
from jax.experimental.pallas import tpu as pltpu

_LANE = 128  # TPU lane width; pad OUT up to this for lane-dense stores.


def _linear_kernel(x_ref, w_ref, b_ref, o_ref):
    # x_ref: (TB, IN)   w_ref: (IN, OUT_P)   b_ref: (1, OUT_P)   o_ref: (TB, OUT_P)
    acc = jnp.dot(x_ref[...], w_ref[...], preferred_element_type=jnp.float32)
    o_ref[...] = (acc + b_ref[...].astype(jnp.float32)).astype(o_ref.dtype)


def prepare_params(weight, bias, *, compute_dtype=jnp.float32):
    """One-time parameter prep (NOT per-forward-call).

    weight: (OUT, IN) in PyTorch nn.Linear layout, bias: (OUT,).
    Returns weight as (IN, OUT_P) and bias as (1, OUT_P), OUT_P padded to a
    multiple of 128 with zeros so the kernel's output tile is lane-dense.
    """
    OUT, IN = weight.shape
    out_p = max(_LANE, ((OUT + _LANE - 1) // _LANE) * _LANE)
    w_p = jnp.zeros((IN, out_p), dtype=compute_dtype)
    w_p = w_p.at[:, :OUT].set(weight.T.astype(compute_dtype))
    b_p = jnp.zeros((1, out_p), dtype=jnp.float32)
    b_p = b_p.at[:, :OUT].set(bias.astype(jnp.float32))
    return w_p, b_p


@functools.partial(jax.jit, static_argnames=("out_features", "block_b"))
def linear_pallas(x, w_padded, b_padded, *, out_features, block_b=512):
    """Forward pass of nn.Linear(in_features, out_features) via Pallas.

    x:        (..., IN)   (any leading dims, like nn.Linear)
    w_padded: (IN, OUT_P)  from prepare_params (resident across batch tiles)
    b_padded: (1, OUT_P)
    returns   (..., out_features)
    """
    IN = x.shape[-1]
    OUT_P = w_padded.shape[1]

    lead_shape = x.shape[:-1]
    x2 = x.reshape(-1, IN).astype(w_padded.dtype)
    B = x2.shape[0]

    # Tile the batch; weight/bias blocks are grid-invariant (stay in VMEM).
    TB = min(block_b, B)
    grid = (pl.cdiv(B, TB),)

    flops = 2 * B * IN * OUT_P
    bytes_accessed = (
        x2.size * x2.dtype.itemsize
        + w_padded.size * w_padded.dtype.itemsize
        + b_padded.size * b_padded.dtype.itemsize
        + B * OUT_P * 4
    )

    out_padded = pl.pallas_call(
        _linear_kernel,
        out_shape=jax.ShapeDtypeStruct((B, OUT_P), jnp.float32),
        grid_spec=pl.GridSpec(
            grid=grid,
            in_specs=[
                pl.BlockSpec((TB, IN), lambda i: (i, 0)),      # x: tiled over batch
                pl.BlockSpec((IN, OUT_P), lambda i: (0, 0)),   # W: grid-invariant
                pl.BlockSpec((1, OUT_P), lambda i: (0, 0)),    # b: grid-invariant
            ],
            out_specs=pl.BlockSpec((TB, OUT_P), lambda i: (i, 0)),
        ),
        compiler_params=pltpu.CompilerParams(
            dimension_semantics=("parallel",),  # independent batch tiles
        ),
        cost_estimate=pl.CostEstimate(
            flops=flops, transcendentals=0, bytes_accessed=bytes_accessed
        ),
    )(x2, w_padded, b_padded)

    # Drop zero-padded output lanes and restore leading dims.
    return out_padded[:, :out_features].reshape(*lead_shape, out_features)


if __name__ == "__main__":
    # Small deterministic example consistent with final_model(in_features=32, ...)
    # -> nn.Linear(32, 2).
    B, IN, OUT = 8, 32, 2

    key = jax.random.PRNGKey(0)
    kx, kw, kb = jax.random.split(key, 3)

    x = jax.random.normal(kx, (B, IN), dtype=jnp.float32)
    # Mimic nn.Linear init: uniform(-1/sqrt(IN), 1/sqrt(IN)), PyTorch (OUT, IN) layout.
    bound = 1.0 / jnp.sqrt(jnp.float32(IN))
    weight = jax.random.uniform(kw, (OUT, IN), minval=-bound, maxval=bound,
                                dtype=jnp.float32)
    bias = jax.random.uniform(kb, (OUT,), minval=-bound, maxval=bound,
                              dtype=jnp.float32)

    # One-time parameter setup (transpose + pad to 128 output lanes).
    # For bandwidth-bound large shapes on v6e/v7x, pass compute_dtype=jnp.bfloat16.
    w_p, b_p = prepare_params(weight, bias, compute_dtype=jnp.float32)

    out = linear_pallas(x, w_p, b_p, out_features=OUT)
    jax.block_until_ready(out)

    # Reference forward pass of the original module.
    ref = x @ weight.T + bias
    assert out.shape == (B, OUT), out.shape
    assert jnp.allclose(out, ref, atol=1e-5, rtol=1e-5)

    print("KERNEL_OK")
</pallas_src>

<mosaic_0001>
module attributes {stable_mosaic.version = 11 : i64} {
  func.func @_linear_kernel(%arg0: i32, %arg1: memref<8x32xf32, #tpu.memory_space<vmem>>, %arg2: memref<32x128xf32, #tpu.memory_space<vmem>>, %arg3: memref<1x128xf32, #tpu.memory_space<vmem>>, %arg4: memref<8x128xf32, #tpu.memory_space<vmem>>) attributes {dimension_semantics = [#tpu.dimension_semantics<parallel>], iteration_bounds = array<i64: 1>, scalar_prefetch = 0 : i64, scratch_operands = 0 : i64, tpu.core_type = #tpu.core_type<tc>, window_params = [{transform_indices = @transform_0, window_bounds = array<i64: 8, 32>}, {pipeline_mode = #tpu.pipeline_mode<synchronous>, transform_indices = @transform_1, window_bounds = array<i64: 32, 128>}, {pipeline_mode = #tpu.pipeline_mode<synchronous>, transform_indices = @transform_2, window_bounds = array<i64: 1, 128>}, {transform_indices = @transform_3, window_bounds = array<i64: 8, 128>}]} {
    %c0 = arith.constant 0 : index
    %c0_0 = arith.constant 0 : index
    %0 = vector.load %arg1[%c0, %c0_0] : memref<8x32xf32, #tpu.memory_space<vmem>>, vector<8x32xf32>
    %c0_1 = arith.constant 0 : index
    %c0_2 = arith.constant 0 : index
    %1 = vector.load %arg2[%c0_1, %c0_2] : memref<32x128xf32, #tpu.memory_space<vmem>>, vector<32x128xf32>
    %cst = arith.constant dense<0.000000e+00> : vector<8x128xf32>
    %2 = tpu.matmul %0, %1, %cst {dimension_numbers = #tpu.dot_dimension_numbers<[1], [0], [0], [1], [0, 0, 1, 1], [], []>} : vector<8x32xf32>, vector<32x128xf32>, vector<8x128xf32> -> vector<8x128xf32>
    %c0_3 = arith.constant 0 : index
    %c0_4 = arith.constant 0 : index
    %3 = vector.load %arg3[%c0_3, %c0_4] : memref<1x128xf32, #tpu.memory_space<vmem>>, vector<1x128xf32>
    %4 = vector.broadcast %3 : vector<1x128xf32> to vector<8x128xf32>
    %5 = arith.addf %2, %4 : vector<8x128xf32>
    %c0_5 = arith.constant 0 : index
    %c0_6 = arith.constant 0 : index
    %6 = vector.load %arg4[%c0_5, %c0_6] : memref<8x128xf32, #tpu.memory_space<vmem>>, vector<8x128xf32>
    tpu.vector_store %arg4[%c0_5, %c0_6], %5 {strides = array<i32>} : memref<8x128xf32, #tpu.memory_space<vmem>>, vector<8x128xf32>,
    return
  }
  func.func @transform_0(%arg0: i32) -> (i32, i32) {
    %c0_i32 = arith.constant 0 : i32
    %c0_i32_0 = arith.constant 0 : i32
    return %arg0, %c0_i32 : i32, i32
  }
  func.func @transform_1(%arg0: i32) -> (i32, i32) {
    %c0_i32 = arith.constant 0 : i32
    %c0_i32_0 = arith.constant 0 : i32
    %c0_i32_1 = arith.constant 0 : i32
    return %c0_i32, %c0_i32_0 : i32, i32
  }
  func.func @transform_2(%arg0: i32) -> (i32, i32) {
    %c0_i32 = arith.constant 0 : i32
    %c0_i32_0 = arith.constant 0 : i32
    %c0_i32_1 = arith.constant 0 : i32
    return %c0_i32, %c0_i32_0 : i32, i32
  }
  func.func @transform_3(%arg0: i32) -> (i32, i32) {
    %c0_i32 = arith.constant 0 : i32
    %c0_i32_0 = arith.constant 0 : i32
    return %arg0, %c0_i32 : i32, i32
  }
}

</mosaic_0001>

<llo_original>
// kernel: linear_pallas.1
$region0: #{linear_pallas.1}
  #allocation0 [shape = 'u32[]', space=smem, size = 0x4, offset = 0x4, fixed_abs, tag = 'smem constant byte address 0x4 - core index']
  #allocation1 [shape = 'u32[144,128]{1,0:T(1,128)}', space=vmem, size = 0x12000, scoped, tag = 'internal scratch']
  %s0 = inlined_call_operand.hbm [shape: f32[8,32], index: 0, kind: input, shape index: {}]
  %s1 = inlined_call_operand.hbm [shape: f32[32,128], index: 1, kind: input, shape index: {}]
  %s2 = inlined_call_operand.vmem [shape: f32[1,128], index: 2, kind: input, shape index: {}]
  %s3 = inlined_call_operand.vmem [shape: f32[8,128], index: 3, kind: output, shape index: {}]
  %s4 = sld [smem:[#allocation0]]
  $region30: #{linear_pallas.1} parent=0
    _
  %s6 = ssub.s32 1, %s4
  %s7 = scalar_select 0, %s6, %s4
  $region1: #{linear_pallas.1} parent=0
    #allocation2 [shape = 'u8[4096]{0}', space=vmem, size = 0x1000, scoped, tag = 'input window, operand 0, single buffered']
    #allocation3 [shape = 's32[1]{0}', space=sflag, size = 0x4, scoped, tag = 'scoped memory for linear_pallas.1']
    #allocation4 [shape = 'u8[16384]{0}', space=vmem, size = 0x4000, scoped, tag = 'input window, operand 1, single buffered']
    #allocation5 [shape = 's32[1]{0}', space=sflag, size = 0x4, scoped, tag = 'scoped memory for linear_pallas.1']
    %8 = vsyncpa [#allocation3], 0
    %9 = vsyncpa [#allocation5], 0
    // Predicated region
    $region2: #{linear_pallas.1} parent=1 // pred_check
      _
    $region3: #{linear_pallas.1} parent=1 // pred_check_branch
      %11 = sbr.rel (0) target = $region5
    $region4: #{linear_pallas.1} parent=1 // pred_region
      %s13 = ssub.s32 128, 128
      %14 = vsyncadd [#allocation3], %s13
      %s16 = sshll.u32 [#allocation2], 4
      %s17 = int_to_ptr.vmem [resolvable:$true] %s16
      %19 = dma.hbm_to_vmem [thread:$0]  %s0, 128, %s17, [#allocation3]
    $region5: #{linear_pallas.1} parent=1 // pred_fallthru
      _
    // Predicated region
    $region6: #{linear_pallas.1} parent=1 // pred_check
      _
    $region7: #{linear_pallas.1} parent=1 // pred_check_branch
      %21 = sbr.rel (0) target = $region9
    $region8: #{linear_pallas.1} parent=1 // pred_region
      %s23 = ssub.s32 512, 512
      %24 = vsyncadd [#allocation5], %s23
      %s25 = sshll.u32 [#allocation4], 4
      %s26 = int_to_ptr.vmem [resolvable:$true] %s25
      %31 = dma.hbm_to_vmem [thread:$0]  %s1, 512, %s26, [#allocation5], 128, 128, 8
    $region9: #{linear_pallas.1} parent=1 // pred_fallthru
      _
    // Predicated region
    $region10: #{linear_pallas.1} parent=1 // pred_check
      _
    $region11: #{linear_pallas.1} parent=1 // pred_check_branch
      %33 = sbr.rel (0) target = $region13
    $region12: #{linear_pallas.1} parent=1 // pred_region
      _
    $region13: #{linear_pallas.1} parent=1 // pred_fallthru
      _
    // Predicated region
    $region14: #{linear_pallas.1} parent=1 // pred_check
      _
    $region15: #{linear_pallas.1} parent=1 // pred_check_branch
      %35 = sbr.rel (0) target = $region17
    $region16: #{linear_pallas.1} parent=1 // pred_region
      %36 = dma.done [#allocation3], 128
    $region17: #{linear_pallas.1} parent=1 // pred_fallthru
      _
    // Predicated region
    $region18: #{linear_pallas.1} parent=1 // pred_check
      _
    $region19: #{linear_pallas.1} parent=1 // pred_check_branch
      %38 = sbr.rel (0) target = $region21
    $region20: #{linear_pallas.1} parent=1 // pred_region
      %39 = dma.done [#allocation5], 512
    $region21: #{linear_pallas.1} parent=1 // pred_fallthru
      _
    %v40 = vld [vmem:[#allocation2] sm:$0xff]
    %v41 = vld [vmem:[#allocation4] sm:$0xff]
    %v42 = vld [vmem:[#allocation4 + $0x8] sm:$0xff]
    %v43 = vld [vmem:[#allocation4 + $0x10] sm:$0xff]
    %v44 = vld [vmem:[#allocation4 + $0x18] sm:$0xff]
    %v45 = vld [vmem:[%s2] sm:$0x1]
    %v47 = vlaneseq
    %v48 = vshrl.u32 %v47, 7
    %v49 = vsub.s32 0, %v48
    %v50 = vrot.slane %v45, %v49
    %vm52 = vcmask 261120
    %v54 = vsel %vm52, %v40, 0
    %56 = vmatprep.subr.mxu0 0.0
    %57 = vmatpush1.msra.mxu0 %v41
    %58 = vmatprep.subr.mxu0 0.0
    %59 = vmatpush1.msra.mxu0 %v42
    %60 = vmatprep.subr.mxu0 0.0
    %61 = vmatpush1.msra.mxu0 %v43
    %62 = vmatprep.subr.mxu0 0.0
    %63 = vmatpush1.msra.mxu0 %v44
    %64 = vmatprep.subr.mxu0 0.0
    %65 = vmatpush1.msra.mxu0 0.0
    %66 = vmatprep.subr.mxu0 0.0
    %67 = vmatpush1.msra.mxu0 0.0
    %68 = vmatprep.subr.mxu0 0.0
    %69 = vmatpush1.msra.mxu0 0.0
    %70 = vmatprep.subr.mxu0 0.0
    %71 = vmatpush1.msra.mxu0 0.0
    %72 = vmatprep.subr.mxu0 0.0
    %73 = vmatpush1.msra.mxu0 0.0
    %74 = vmatprep.subr.mxu0 0.0
    %75 = vmatpush1.msra.mxu0 0.0
    %76 = vmatprep.subr.mxu0 0.0
    %77 = vmatpush1.msra.mxu0 0.0
    %78 = vmatprep.subr.mxu0 0.0
    %79 = vmatpush1.msra.mxu0 0.0
    %80 = vmatprep.subr.mxu0 0.0
    %81 = vmatpush1.msra.mxu0 0.0
    %82 = vmatprep.subr.mxu0 0.0
    %83 = vmatpush1.msra.mxu0 0.0
    %84 = vmatprep.subr.mxu0 0.0
    %85 = vmatpush1.msra.mxu0 0.0
    %86 = vmatprep.subr.mxu0 0.0
    %87 = vmatpush1.msra.mxu0 0.0
    %88 = vmatprep.subr.mxu0 0.0
    %89 = vmatpush1.msra.mxu0 0.0
    %90 = vmatprep.subr.mxu0 0.0
    %91 = vmatpush1.msra.mxu0 0.0
    %92 = vmatprep.subr.mxu0 0.0
    %93 = vmatpush1.msra.mxu0 0.0
    %94 = vmatprep.subr.mxu0 0.0
    %95 = vmatpush1.msra.mxu0 0.0
    %96 = vmatprep.subr.mxu0 0.0
    %97 = vmatpush1.msra.mxu0 0.0
    %98 = vmatprep.subr.mxu0 0.0
    %99 = vmatpush1.msra.mxu0 0.0
    %100 = vmatprep.subr.mxu0 0.0
    %101 = vmatpush1.msra.mxu0 0.0
    %102 = vmatprep.subr.mxu0 0.0
    %103 = vmatpush1.msra.mxu0 0.0
    %104 = vmatprep.subr.mxu0 0.0
    %105 = vmatpush1.msra.mxu0 0.0
    %106 = vmatprep.subr.mxu0 0.0
    %107 = vmatpush1.msra.mxu0 0.0
    %108 = vmatprep.subr.mxu0 0.0
    %109 = vmatpush1.msra.mxu0 0.0
    %110 = vmatprep.subr.mxu0 0.0
    %111 = vmatpush1.msra.mxu0 0.0
    %112 = vmatprep.subr.mxu0 0.0
    %113 = vmatpush1.msra.mxu0 0.0
    %114 = vmatprep.subr.mxu0 0.0
    %115 = vmatpush1.msra.mxu0 0.0
    %116 = vmatprep.subr.mxu0 0.0
    %117 = vmatpush1.msra.mxu0 0.0
    %118 = vmatprep.subr.mxu0 0.0
    %119 = vmatpush1.msra.mxu0 0.0
    %120 = vmatprep.mubr.f32.mxu0 0.0
    %121 = vmatmul.mubr.f32.gmra.mrb[0].mxu0 %v54
    %v122 = vpop.f32.mrb[0].mxu0
    %v123 = vadd.f32 %v50, %v122
    %v124 = vpop.f32.mrb[0].mxu0
    %125 = vdwg.mxu0
    %126 = vst [vmem:[%s3] sm:$0xff] %v123
    // Predicated region
    $region22: #{linear_pallas.1} parent=1 // pred_check
      _
    $region23: #{linear_pallas.1} parent=1 // pred_check_branch
      %128 = sbr.rel (0) target = $region25
    $region24: #{linear_pallas.1} parent=1 // pred_region
      _
    $region25: #{linear_pallas.1} parent=1 // pred_fallthru
      _
    // Predicated region
    $region26: #{linear_pallas.1} parent=1 // pred_check
      _
    $region27: #{linear_pallas.1} parent=1 // pred_check_branch
      %130 = sbr.rel (0) target = $region29
    $region28: #{linear_pallas.1} parent=1 // pred_region
      _
    $region29: #{linear_pallas.1} parent=1 // pred_fallthru
      _
    %131 = vsyncpa [#allocation3], 1
    %132 = vsyncpa [#allocation5], 1

</llo_original>
